<compile_context>
chip_gen: v7x
topology: tpu7x:2x2x1
jax: 0.10.0
libtpu: 0.0.40
codegen_flags: <defaults>
</compile_context>

<pallas_src>
import functools
import math

import jax
import jax.numpy as jnp
from jax.experimental import pallas as pl
from jax.experimental.pallas import tpu as pltpu

LANE = 128           # TPU lane width.
BATCH_PAD = 16       # sublane-group pad for bf16-packed activations.


def _round_up(x, m):
    return ((x + m - 1) // m) * m


# ---------------------------------------------------------------------------
# Fused Pallas kernel: all GRU layers + FC head, fully resident in VMEM/vregs
# ---------------------------------------------------------------------------
def grunn_fused_kernel(x_ref, wi_ref, bi_ref, bhn_ref, wfc_ref, bfc_ref, o_ref,
                       *, num_layers, hp):
    # x_ref: (Bp, hp) f32, feature dim zero-padded to hp; padded rows are zero.
    h = x_ref[...]
    for l in range(num_layers):  # static unroll: layer count is compile-time constant
        # One (Bp, hp) @ (hp, gw) bf16 matmul (f32 accumulate) produces all
        # three gates packed into one 128-lane slab: r | z | n at hp-strides.
        g = jnp.dot(h.astype(jnp.bfloat16), wi_ref[l],
                    preferred_element_type=jnp.float32) + bi_ref[l]
        r = jax.nn.sigmoid(g[:, 0 * hp:1 * hp])              # reset  (bir+bhr folded)
        z = jax.nn.sigmoid(g[:, 1 * hp:2 * hp])              # update (biz+bhz folded)
        n = jnp.tanh(g[:, 2 * hp:3 * hp] + r * bhn_ref[l])   # bhn scaled by r
        h = (1.0 - z) * n                                    # h0 == 0  =>  z*h0 == 0
        # TODO(synk): if num_layers / hidden_size ever grow, turn this static
        # loop into a grid axis (wi BlockSpec (1,hp,gw), "arbitrary", h carried
        # in VMEM scratch) so per-layer weight DMA double-buffers with compute.
    # FC head: VPU multiply + XLU lane-reduce against the single live weight
    # row (only hp lanes are real), then broadcast into a lane-dense slab.
    o = jnp.sum(h * wfc_ref[:, :hp], axis=-1, keepdims=True)   # (Bp, 1)
    o_ref[...] = o + bfc_ref[...]                               # (Bp, 128) lane-dense


def _vmem_spec():
    return pl.BlockSpec(memory_space=pltpu.MemorySpace.VMEM)


def grunn_forward(x, packed):
    """x: (B, 7) float32 -> (B, 1) float32. Matches GRUNN.forward in eval mode."""
    batch, in_dim = x.shape
    hp = packed["hp"]
    gw = packed["gw"]
    num_layers = packed["num_layers"]
    bp = _round_up(batch, BATCH_PAD)

    # Pad batch to a full sublane group and features to hp lanes (zeros).
    x_pad = jnp.zeros((bp, hp), jnp.float32).at[:batch, :in_dim].set(
        x.astype(jnp.float32))

    kernel = functools.partial(grunn_fused_kernel, num_layers=num_layers, hp=hp)

    flops = 2 * bp * hp * gw * num_layers + 2 * bp * hp
    transcendentals = 3 * bp * hp * num_layers
    bytes_accessed = (x_pad.size * 4 + packed["wi"].size * 2 +
                      packed["bi"].size * 4 + packed["bhn"].size * 4 +
                      packed["wfc"].size * 4 + packed["bfc"].size * 4 +
                      bp * LANE * 4)

    out_pad = pl.pallas_call(
        kernel,
        out_shape=jax.ShapeDtypeStruct((bp, LANE), jnp.float32),
        in_specs=[_vmem_spec() for _ in range(6)],
        out_specs=_vmem_spec(),
        cost_estimate=pl.CostEstimate(flops=flops,
                                      transcendentals=transcendentals,
                                      bytes_accessed=bytes_accessed),
        # TODO(synk): if batch ever scales to hundreds of rows, add a batch
        # grid axis (tile a multiple of 256) with
        # dimension_semantics=("parallel",) so v7x's second TensorCore is used
        # and x/out get pipelined; weights then use index_map -> block 0.
    )(x_pad, packed["wi"], packed["bi"], packed["bhn"],
      packed["wfc"], packed["bfc"])
    return out_pad[:batch, :1]


# ---------------------------------------------------------------------------
# Parameter construction (deterministic, PyTorch-style uniform init) + packing
# ---------------------------------------------------------------------------
def init_raw_params(key, input_size, hidden_size, num_layers):
    stdv = 1.0 / math.sqrt(hidden_size)
    params = {"gru": [], "fc": None}
    for layer in range(num_layers):
        in_dim = input_size if layer == 0 else hidden_size
        shapes = [
            ("wir", (in_dim, hidden_size)), ("wiz", (in_dim, hidden_size)),
            ("win", (in_dim, hidden_size)),
            ("whr", (hidden_size, hidden_size)), ("whz", (hidden_size, hidden_size)),
            ("whn", (hidden_size, hidden_size)),
            ("bir", (1, hidden_size)), ("biz", (1, hidden_size)),
            ("bin", (1, hidden_size)),
            ("bhr", (1, hidden_size)), ("bhz", (1, hidden_size)),
            ("bhn", (1, hidden_size)),
        ]
        layer_p = []
        for _, shape in shapes:
            key, sub = jax.random.split(key)
            layer_p.append(jax.random.uniform(sub, shape, jnp.float32, -stdv, stdv))
        params["gru"].append(tuple(layer_p))
    key, sub_w = jax.random.split(key)
    key, sub_b = jax.random.split(key)
    params["fc"] = (
        jax.random.uniform(sub_w, (hidden_size, 1), jnp.float32, -stdv, stdv),
        jax.random.uniform(sub_b, (1, 1), jnp.float32, -stdv, stdv),
    )
    return params


def pack_params(raw, input_size, hidden_size, num_layers):
    """Pack gates into one lane slab, fold h0==0 biases, bf16 weights.

    wi:  (L, hp, gw)  bf16, gates at column offsets 0, hp, 2*hp (hp = hidden
         rounded up to 8; gw = 3*hp rounded up to 128 lanes).
    bi:  (L, 1, gw)   f32, (bir+bhr | biz+bhz | bin) at the same offsets.
    bhn: (L, 1, hp)   f32 (kept separate: scaled by r in the kernel).
    wfc: (1, 128)     f32, FC weight row in lanes [0:hidden).
    bfc: (1, 128)     f32, FC bias broadcast across all lanes.
    """
    hp = _round_up(hidden_size, 8)            # contraction dim = real hidden size
    gw = max(LANE, _round_up(3 * hp, LANE))   # lane-dense gate slab width
    h = hidden_size
    wi_l, bi_l, bhn_l = [], [], []
    for layer in range(num_layers):
        in_dim = input_size if layer == 0 else hidden_size   # in_dim <= hp (hp >= 8)
        (wir, wiz, win, _whr, _whz, _whn,
         bir, biz, bin_, bhr, bhz, bhn) = raw["gru"][layer]
        wi = jnp.zeros((hp, gw), jnp.float32)
        wi = wi.at[:in_dim, 0 * hp:0 * hp + h].set(wir)
        wi = wi.at[:in_dim, 1 * hp:1 * hp + h].set(wiz)
        wi = wi.at[:in_dim, 2 * hp:2 * hp + h].set(win)
        bi = jnp.zeros((1, gw), jnp.float32)
        bi = bi.at[:, 0 * hp:0 * hp + h].set(bir + bhr)   # fold (h0 == 0)
        bi = bi.at[:, 1 * hp:1 * hp + h].set(biz + bhz)   # fold (h0 == 0)
        bi = bi.at[:, 2 * hp:2 * hp + h].set(bin_)        # bhn NOT folded (scaled by r)
        bhn_p = jnp.zeros((1, hp), jnp.float32).at[:, :h].set(bhn)
        wi_l.append(wi)
        bi_l.append(bi)
        bhn_l.append(bhn_p)
    wfc_raw, bfc_raw = raw["fc"]
    wfc = jnp.zeros((1, LANE), jnp.float32).at[0, :h].set(wfc_raw[:, 0])
    bfc = jnp.broadcast_to(bfc_raw, (1, LANE)).astype(jnp.float32)
    return {
        "wi": jnp.stack(wi_l).astype(jnp.bfloat16),   # (L, hp, gw) bf16
        "bi": jnp.stack(bi_l),                        # (L, 1, gw)  f32
        "bhn": jnp.stack(bhn_l),                      # (L, 1, hp)  f32
        "wfc": wfc,                                   # (1, 128)    f32
        "bfc": bfc,                                   # (1, 128)    f32
        "hp": hp, "gw": gw, "num_layers": num_layers,
    }


# ---------------------------------------------------------------------------
# References:
#  * grunn_reference: full f32 GRU-cell equations with h0 = 0 (module semantics)
#  * grunn_reference_packed: same math / same bf16 rounding as the kernel,
#    pure JAX — used for a tight numerical check of the kernel structure.
# ---------------------------------------------------------------------------
def grunn_reference(x, raw, hidden_size):
    batch = x.shape[0]
    h_in = x
    for (wir, wiz, win, whr, whz, whn,
         bir, biz, bin_, bhr, bhz, bhn) in raw["gru"]:
        h = jnp.zeros((batch, hidden_size), jnp.float32)
        r = jax.nn.sigmoid(h_in @ wir + bir + h @ whr + bhr)
        z = jax.nn.sigmoid(h_in @ wiz + biz + h @ whz + bhz)
        n = jnp.tanh(h_in @ win + bin_ + r * (h @ whn + bhn))
        h_in = (1.0 - z) * n + z * h
    wfc, bfc = raw["fc"]
    return h_in @ wfc + bfc


def grunn_reference_packed(x, packed):
    batch, in_dim = x.shape
    hp, num_layers = packed["hp"], packed["num_layers"]
    h = jnp.zeros((batch, hp), jnp.float32).at[:, :in_dim].set(x)
    for l in range(num_layers):
        g = jnp.dot(h.astype(jnp.bfloat16), packed["wi"][l],
                    preferred_element_type=jnp.float32) + packed["bi"][l]
        r = jax.nn.sigmoid(g[:, 0 * hp:1 * hp])
        z = jax.nn.sigmoid(g[:, 1 * hp:2 * hp])
        n = jnp.tanh(g[:, 2 * hp:3 * hp] + r * packed["bhn"][l])
        h = (1.0 - z) * n
    o = jnp.sum(h * packed["wfc"][:, :hp], axis=-1, keepdims=True)
    return o + packed["bfc"][:, :1]


if __name__ == "__main__":
    INPUT_SIZE = 7
    HIDDEN_SIZE = 32
    NUM_LAYERS = 2
    BATCH = 4

    key = jax.random.PRNGKey(0)
    key, xkey = jax.random.split(key)
    x = jax.random.normal(xkey, (BATCH, INPUT_SIZE), jnp.float32)

    raw_params = init_raw_params(key, INPUT_SIZE, HIDDEN_SIZE, NUM_LAYERS)
    packed = pack_params(raw_params, INPUT_SIZE, HIDDEN_SIZE, NUM_LAYERS)

    out = grunn_forward(x, packed)
    out = jax.block_until_ready(out)
    assert out.shape == (BATCH, 1)

    # Tight check: kernel vs a pure-JAX replay of the exact packed/bf16 math.
    ref_packed = grunn_reference_packed(x, packed)
    assert jnp.allclose(out, ref_packed, atol=5e-4, rtol=5e-4), \
        "mismatch vs packed/bf16 reference"

    # Loose check: kernel vs the full-precision f32 module semantics
    # (bf16 weight rounding means the original 1e-5 tolerance no longer applies).
    ref_f32 = grunn_reference(x, raw_params, HIDDEN_SIZE)
    assert jnp.allclose(out, ref_f32, atol=5e-2, rtol=5e-2), \
        "mismatch vs f32 reference"

    print("KERNEL_OK")
</pallas_src>

<mosaic_0001>
module attributes {stable_mosaic.version = 11 : i64} {
  func.func @grunn_fused_kernel(%arg0: memref<16x32xf32, #tpu.memory_space<vmem>>, %arg1: memref<2x32x128xbf16, #tpu.memory_space<vmem>>, %arg2: memref<2x1x128xf32, #tpu.memory_space<vmem>>, %arg3: memref<2x1x32xf32, #tpu.memory_space<vmem>>, %arg4: memref<1x128xf32, #tpu.memory_space<vmem>>, %arg5: memref<1x128xf32, #tpu.memory_space<vmem>>, %arg6: memref<16x128xf32, #tpu.memory_space<vmem>>) attributes {dimension_semantics = [], scalar_prefetch = 0 : i64, scratch_operands = 0 : i64, tpu.core_type = #tpu.core_type<tc>} {
    %c0 = arith.constant 0 : index
    %c0_0 = arith.constant 0 : index
    %0 = vector.load %arg0[%c0, %c0_0] : memref<16x32xf32, #tpu.memory_space<vmem>>, vector<16x32xf32>
    %1 = arith.truncf %0 : vector<16x32xf32> to vector<16x32xbf16>
    %c0_1 = arith.constant 0 : index
    %c0_2 = arith.constant 0 : index
    %c0_3 = arith.constant 0 : index
    %2 = vector.load %arg1[%c0_1, %c0_2, %c0_3] : memref<2x32x128xbf16, #tpu.memory_space<vmem>>, vector<1x32x128xbf16>
    %3 = vector.shape_cast %2 : vector<1x32x128xbf16> to vector<32x128xbf16>
    %cst = arith.constant dense<0.000000e+00> : vector<16x128xf32>
    %4 = tpu.matmul %1, %3, %cst {dimension_numbers = #tpu.dot_dimension_numbers<[1], [0], [0], [1], [0, 0, 1, 1], [], []>} : vector<16x32xbf16>, vector<32x128xbf16>, vector<16x128xf32> -> vector<16x128xf32>
    %c0_4 = arith.constant 0 : index
    %c0_5 = arith.constant 0 : index
    %c0_6 = arith.constant 0 : index
    %5 = vector.load %arg2[%c0_4, %c0_5, %c0_6] : memref<2x1x128xf32, #tpu.memory_space<vmem>>, vector<1x1x128xf32>
    %6 = vector.shape_cast %5 : vector<1x1x128xf32> to vector<1x128xf32>
    %7 = vector.broadcast %6 : vector<1x128xf32> to vector<16x128xf32>
    %8 = arith.addf %4, %7 : vector<16x128xf32>
    %9 = vector.extract_strided_slice %8 {offsets = [0, 0], sizes = [16, 32], strides = [1, 1]} : vector<16x128xf32> to vector<16x32xf32>
    %10 = arith.negf %9 : vector<16x32xf32>
    %11 = math.exp %10 : vector<16x32xf32>
    %cst_7 = arith.constant 1.000000e+00 : f32
    %12 = vector.broadcast %cst_7 : f32 to vector<16x32xf32>
    %13 = arith.addf %12, %11 : vector<16x32xf32>
    %14 = arith.divf %12, %13 : vector<16x32xf32>
    %15 = vector.extract_strided_slice %8 {offsets = [0, 32], sizes = [16, 32], strides = [1, 1]} : vector<16x128xf32> to vector<16x32xf32>
    %16 = arith.negf %15 : vector<16x32xf32>
    %17 = math.exp %16 : vector<16x32xf32>
    %cst_8 = arith.constant 1.000000e+00 : f32
    %18 = vector.broadcast %cst_8 : f32 to vector<16x32xf32>
    %19 = arith.addf %18, %17 : vector<16x32xf32>
    %20 = arith.divf %18, %19 : vector<16x32xf32>
    %21 = vector.extract_strided_slice %8 {offsets = [0, 64], sizes = [16, 32], strides = [1, 1]} : vector<16x128xf32> to vector<16x32xf32>
    %c0_9 = arith.constant 0 : index
    %c0_10 = arith.constant 0 : index
    %c0_11 = arith.constant 0 : index
    %22 = vector.load %arg3[%c0_9, %c0_10, %c0_11] : memref<2x1x32xf32, #tpu.memory_space<vmem>>, vector<1x1x32xf32>
    %23 = vector.shape_cast %22 : vector<1x1x32xf32> to vector<1x32xf32>
    %24 = vector.broadcast %23 : vector<1x32xf32> to vector<16x32xf32>
    %25 = arith.mulf %14, %24 : vector<16x32xf32>
    %26 = arith.addf %21, %25 : vector<16x32xf32>
    %27 = math.tanh %26 : vector<16x32xf32>
    %cst_12 = arith.constant 1.000000e+00 : f32
    %28 = vector.broadcast %cst_12 : f32 to vector<16x32xf32>
    %29 = arith.subf %28, %20 : vector<16x32xf32>
    %30 = arith.mulf %29, %27 : vector<16x32xf32>
    %31 = arith.truncf %30 : vector<16x32xf32> to vector<16x32xbf16>
    %c1 = arith.constant 1 : index
    %c0_13 = arith.constant 0 : index
    %c0_14 = arith.constant 0 : index
    %32 = vector.load %arg1[%c1, %c0_13, %c0_14] : memref<2x32x128xbf16, #tpu.memory_space<vmem>>, vector<1x32x128xbf16>
    %33 = vector.shape_cast %32 : vector<1x32x128xbf16> to vector<32x128xbf16>
    %cst_15 = arith.constant dense<0.000000e+00> : vector<16x128xf32>
    %34 = tpu.matmul %31, %33, %cst_15 {dimension_numbers = #tpu.dot_dimension_numbers<[1], [0], [0], [1], [0, 0, 1, 1], [], []>} : vector<16x32xbf16>, vector<32x128xbf16>, vector<16x128xf32> -> vector<16x128xf32>
    %c1_16 = arith.constant 1 : index
    %c0_17 = arith.constant 0 : index
    %c0_18 = arith.constant 0 : index
    %35 = vector.load %arg2[%c1_16, %c0_17, %c0_18] : memref<2x1x128xf32, #tpu.memory_space<vmem>>, vector<1x1x128xf32>
    %36 = vector.shape_cast %35 : vector<1x1x128xf32> to vector<1x128xf32>
    %37 = vector.broadcast %36 : vector<1x128xf32> to vector<16x128xf32>
    %38 = arith.addf %34, %37 : vector<16x128xf32>
    %39 = vector.extract_strided_slice %38 {offsets = [0, 0], sizes = [16, 32], strides = [1, 1]} : vector<16x128xf32> to vector<16x32xf32>
    %40 = arith.negf %39 : vector<16x32xf32>
    %41 = math.exp %40 : vector<16x32xf32>
    %cst_19 = arith.constant 1.000000e+00 : f32
    %42 = vector.broadcast %cst_19 : f32 to vector<16x32xf32>
    %43 = arith.addf %42, %41 : vector<16x32xf32>
    %44 = arith.divf %42, %43 : vector<16x32xf32>
    %45 = vector.extract_strided_slice %38 {offsets = [0, 32], sizes = [16, 32], strides = [1, 1]} : vector<16x128xf32> to vector<16x32xf32>
    %46 = arith.negf %45 : vector<16x32xf32>
    %47 = math.exp %46 : vector<16x32xf32>
    %cst_20 = arith.constant 1.000000e+00 : f32
    %48 = vector.broadcast %cst_20 : f32 to vector<16x32xf32>
    %49 = arith.addf %48, %47 : vector<16x32xf32>
    %50 = arith.divf %48, %49 : vector<16x32xf32>
    %51 = vector.extract_strided_slice %38 {offsets = [0, 64], sizes = [16, 32], strides = [1, 1]} : vector<16x128xf32> to vector<16x32xf32>
    %c1_21 = arith.constant 1 : index
    %c0_22 = arith.constant 0 : index
    %c0_23 = arith.constant 0 : index
    %52 = vector.load %arg3[%c1_21, %c0_22, %c0_23] : memref<2x1x32xf32, #tpu.memory_space<vmem>>, vector<1x1x32xf32>
    %53 = vector.shape_cast %52 : vector<1x1x32xf32> to vector<1x32xf32>
    %54 = vector.broadcast %53 : vector<1x32xf32> to vector<16x32xf32>
    %55 = arith.mulf %44, %54 : vector<16x32xf32>
    %56 = arith.addf %51, %55 : vector<16x32xf32>
    %57 = math.tanh %56 : vector<16x32xf32>
    %cst_24 = arith.constant 1.000000e+00 : f32
    %58 = vector.broadcast %cst_24 : f32 to vector<16x32xf32>
    %59 = arith.subf %58, %50 : vector<16x32xf32>
    %60 = arith.mulf %59, %57 : vector<16x32xf32>
    %c0_25 = arith.constant 0 : index
    %c0_26 = arith.constant 0 : index
    %61 = vector.load %arg4[%c0_25, %c0_26] : memref<1x128xf32, #tpu.memory_space<vmem>>, vector<1x32xf32>
    %62 = vector.broadcast %61 : vector<1x32xf32> to vector<16x32xf32>
    %63 = arith.mulf %60, %62 : vector<16x32xf32>
    %cst_27 = arith.constant dense<0.000000e+00> : vector<16xf32>
    %64 = vector.multi_reduction <add>, %63, %cst_27 [1] : vector<16x32xf32> to vector<16xf32>
    %65 = vector.shape_cast %64 : vector<16xf32> to vector<16x1xf32>
    %c0_28 = arith.constant 0 : index
    %c0_29 = arith.constant 0 : index
    %66 = vector.load %arg5[%c0_28, %c0_29] : memref<1x128xf32, #tpu.memory_space<vmem>>, vector<1x128xf32>
    %67 = vector.broadcast %65 : vector<16x1xf32> to vector<16x128xf32>
    %68 = vector.broadcast %66 : vector<1x128xf32> to vector<16x128xf32>
    %69 = arith.addf %67, %68 : vector<16x128xf32>
    %c0_30 = arith.constant 0 : index
    %c0_31 = arith.constant 0 : index
    %70 = vector.load %arg6[%c0_30, %c0_31] : memref<16x128xf32, #tpu.memory_space<vmem>>, vector<16x128xf32>
    tpu.vector_store %arg6[%c0_30, %c0_31], %69 {strides = array<i32>} : memref<16x128xf32, #tpu.memory_space<vmem>>, vector<16x128xf32>,
    return
  }
}

</mosaic_0001>

<llo_original>
// kernel: tpu_custom_call.1
$region0: #{tpu_custom_call.1}
  #allocation0 [shape = 'u32[]', space=smem, size = 0x4, offset = 0x4, fixed_abs, tag = 'smem constant byte address 0x4 - core index']
  #allocation1 [shape = 'u32[144,128]{1,0:T(1,128)}', space=vmem, size = 0x12000, scoped, tag = 'internal scratch']
  %s0 = inlined_call_operand.hbm [shape: f32[16,32], index: 0, kind: input, shape index: {}]
  %s1 = inlined_call_operand.hbm [shape: bf16[2,32,128], index: 1, kind: input, shape index: {}]
  %s2 = inlined_call_operand.vmem [shape: f32[2,1,128], index: 2, kind: input, shape index: {}]
  %s3 = inlined_call_operand.vmem [shape: f32[2,1,32], index: 3, kind: input, shape index: {}]
  %s4 = inlined_call_operand.vmem [shape: f32[1,128], index: 4, kind: input, shape index: {}]
  %s5 = inlined_call_operand.vmem [shape: f32[1,128], index: 5, kind: input, shape index: {}]
  %s6 = inlined_call_operand.hbm [shape: f32[16,128], index: 6, kind: output, shape index: {}]
  %s7 = sld [smem:[#allocation0]]
  $region42: #{tpu_custom_call.1} parent=0
    _
  %s9 = ssub.s32 1, %s7
  %s10 = scalar_select 0, %s9, %s7
  $region1: #{tpu_custom_call.1} parent=0
    #allocation2 [shape = 'u8[8192]{0}', space=vmem, size = 0x2000, scoped, tag = 'input window, operand 0, single buffered']
    #allocation3 [shape = 's32[1]{0}', space=sflag, size = 0x4, scoped, tag = 'scoped memory for tpu_custom_call.1']
    #allocation4 [shape = 's32[1]{0}', space=sflag, size = 0x4, scoped, tag = 'scoped memory for tpu_custom_call.1']
    #allocation5 [shape = 'u8[16384]{0}', space=vmem, size = 0x4000, scoped, tag = 'input window, operand 1, single buffered']
    #allocation6 [shape = 's32[1]{0}', space=sflag, size = 0x4, scoped, tag = 'scoped memory for tpu_custom_call.1']
    #allocation7 [shape = 'u8[8192]{0}', space=vmem, size = 0x2000, scoped, tag = 'output window, operand 0, single buffered']
    %11 = vsyncpa [#allocation3], 0
    %12 = vsyncpa [#allocation6], 0
    %13 = vsyncpa [#allocation4], 0
    // Predicated region
    $region2: #{tpu_custom_call.1} parent=1 // pred_check
      _
    $region3: #{tpu_custom_call.1} parent=1 // pred_check_branch
      %15 = sbr.rel (0) target = $region5
    $region4: #{tpu_custom_call.1} parent=1 // pred_region
      %s17 = ssub.s32 256, 256
      %18 = vsyncadd [#allocation3], %s17
      %s19 = sshll.u32 [#allocation2], 4
      %s20 = int_to_ptr.vmem [resolvable:$true] %s19
      %25 = dma.hbm_to_vmem [thread:$0]  %s0, 256, %s20, [#allocation3], 128, 128, 8
    $region5: #{tpu_custom_call.1} parent=1 // pred_fallthru
      _
    // Predicated region
    $region6: #{tpu_custom_call.1} parent=1 // pred_check
      _
    $region7: #{tpu_custom_call.1} parent=1 // pred_check_branch
      %27 = sbr.rel (0) target = $region9
    $region8: #{tpu_custom_call.1} parent=1 // pred_region
      %s29 = ssub.s32 512, 512
      %30 = vsyncadd [#allocation6], %s29
      %s31 = sshll.u32 [#allocation5], 4
      %s32 = int_to_ptr.vmem [resolvable:$true] %s31
      %37 = dma.hbm_to_vmem [thread:$0]  %s1, 512, %s32, [#allocation6], 64, 64, 4
    $region9: #{tpu_custom_call.1} parent=1 // pred_fallthru
      _
    // Predicated region
    $region10: #{tpu_custom_call.1} parent=1 // pred_check
      _
    $region11: #{tpu_custom_call.1} parent=1 // pred_check_branch
      %39 = sbr.rel (0) target = $region13
    $region12: #{tpu_custom_call.1} parent=1 // pred_region
      _
    $region13: #{tpu_custom_call.1} parent=1 // pred_fallthru
      _
    // Predicated region
    $region14: #{tpu_custom_call.1} parent=1 // pred_check
      _
    $region15: #{tpu_custom_call.1} parent=1 // pred_check_branch
      %41 = sbr.rel (0) target = $region17
    $region16: #{tpu_custom_call.1} parent=1 // pred_region
      _
    $region17: #{tpu_custom_call.1} parent=1 // pred_fallthru
      _
    // Predicated region
    $region18: #{tpu_custom_call.1} parent=1 // pred_check
      _
    $region19: #{tpu_custom_call.1} parent=1 // pred_check_branch
      %43 = sbr.rel (0) target = $region21
    $region20: #{tpu_custom_call.1} parent=1 // pred_region
      _
    $region21: #{tpu_custom_call.1} parent=1 // pred_fallthru
      _
    // Predicated region
    $region22: #{tpu_custom_call.1} parent=1 // pred_check
      _
    $region23: #{tpu_custom_call.1} parent=1 // pred_check_branch
      %45 = sbr.rel (0) target = $region25
    $region24: #{tpu_custom_call.1} parent=1 // pred_region
      _
    $region25: #{tpu_custom_call.1} parent=1 // pred_fallthru
      _
    // Predicated region
    $region26: #{tpu_custom_call.1} parent=1 // pred_check
      _
    $region27: #{tpu_custom_call.1} parent=1 // pred_check_branch
      %47 = sbr.rel (0) target = $region29
    $region28: #{tpu_custom_call.1} parent=1 // pred_region
      %48 = dma.done [#allocation3], 256
    $region29: #{tpu_custom_call.1} parent=1 // pred_fallthru
      _
    // Predicated region
    $region30: #{tpu_custom_call.1} parent=1 // pred_check
      _
    $region31: #{tpu_custom_call.1} parent=1 // pred_check_branch
      %50 = sbr.rel (0) target = $region33
    $region32: #{tpu_custom_call.1} parent=1 // pred_region
      %51 = dma.done [#allocation6], 512
    $region33: #{tpu_custom_call.1} parent=1 // pred_fallthru
      _
    %v53 = vld [vmem:[#allocation2] sm:$0xff]
    %v54 = vld [vmem:[#allocation2 + $0x8] sm:$0xff]
    %v55 = vpack.c.bf16 %v54, %v53
    %v56 = vld [vmem:[#allocation5] sm:$0xf]
    %v57 = vld [vmem:[#allocation5 + $0x4] sm:$0xf]
    %v58 = vld [vmem:[#allocation5 + $0x8] sm:$0xf]
    %v59 = vld [vmem:[#allocation5 + $0xc] sm:$0xf]
    %v60 = vld [vmem:[%s2] sm:$0x1]
    %v62 = vlaneseq
    %v63 = vshrl.u32 %v62, 7
    %v64 = vsub.s32 0, %v63
    %v65 = vrot.slane %v60, %v64
    %v71 = vunpack.c.l.b16 %v56
    %v72 = vunpack.c.l.b16 %v57
    %v73 = vunpack.c.l.b16 %v58
    %v74 = vunpack.c.l.b16 %v59
    %v75 = vpack.c.b16 %v72, %v71
    %v76 = vpack.c.b16 %v74, %v73
    %vm79 = vcmask 261120
    %v81 = vsel %vm79, %v55, 0
    %83 = vmatprep.subr.bf16.mxu0 0
    %84 = vmatpush1.bf16.msra.mxu0 %v75
    %85 = vmatprep.subr.bf16.mxu0 0
    %86 = vmatpush1.bf16.msra.mxu0 %v76
    %87 = vmatprep.subr.bf16.mxu0 0
    %88 = vmatpush1.bf16.msra.mxu0 0
    %89 = vmatprep.subr.bf16.mxu0 0
    %90 = vmatpush1.bf16.msra.mxu0 0
    %91 = vmatprep.subr.bf16.mxu0 0
    %92 = vmatpush1.bf16.msra.mxu0 0
    %93 = vmatprep.subr.bf16.mxu0 0
    %94 = vmatpush1.bf16.msra.mxu0 0
    %95 = vmatprep.subr.bf16.mxu0 0
    %96 = vmatpush1.bf16.msra.mxu0 0
    %97 = vmatprep.subr.bf16.mxu0 0
    %98 = vmatpush1.bf16.msra.mxu0 0
    %99 = vmatprep.subr.bf16.mxu0 0
    %100 = vmatpush1.bf16.msra.mxu0 0
    %101 = vmatprep.subr.bf16.mxu0 0
    %102 = vmatpush1.bf16.msra.mxu0 0
    %103 = vmatprep.subr.bf16.mxu0 0
    %104 = vmatpush1.bf16.msra.mxu0 0
    %105 = vmatprep.subr.bf16.mxu0 0
    %106 = vmatpush1.bf16.msra.mxu0 0
    %107 = vmatprep.subr.bf16.mxu0 0
    %108 = vmatpush1.bf16.msra.mxu0 0
    %109 = vmatprep.subr.bf16.mxu0 0
    %110 = vmatpush1.bf16.msra.mxu0 0
    %111 = vmatprep.subr.bf16.mxu0 0
    %112 = vmatpush1.bf16.msra.mxu0 0
    %113 = vmatprep.subr.bf16.mxu0 0
    %114 = vmatpush1.bf16.msra.mxu0 0
    %115 = vmatprep.mubr.bf16.mxu0 0
    %116 = vmatmul.mubr.bf16.gmra.mrb[0].mxu0 %v81
    %v117 = vpop.f32.mrb[0].mxu0
    %v118 = vadd.f32 %v65, %v117
    %v119 = vpop.f32.mrb[0].mxu0
    %v120 = vpop.f32.mrb[0].mxu0
    %v121 = vadd.f32 %v65, %v120
    %v122 = vpop.f32.mrb[0].mxu0
    %123 = vdwg.mxu0
    %v124 = vxor.u32 %v118, 2147483648
    %v125 = vxor.u32 %v121, 2147483648
    %v126 = vmul.f32 %v124, 1.442695
    %v127 = vpow.pop %v126
    %v128 = vmul.f32 %v125, 1.442695
    %v129 = vpow.pop %v128
    %v130 = vadd.f32 %v127, 1.0
    %v131 = vadd.f32 %v129, 1.0
    %v132 = vrcp.pop %v130
    %v133 = vmul.f32 1.0, %v132
    %v134 = vrcp.pop %v131
    %v135 = vmul.f32 1.0, %v134
    %v136 = vld [vmem:[%s3] sm:$0x1]
    %v138 = vlaneseq
    %v139 = vshrl.u32 %v138, 7
    %v140 = vsub.s32 0, %v139
    %v141 = vrot.slane %v136, %v140
    %v143 = vmul.f32 %v133, %v141
    %v144 = vmul.f32 %v135, %v141
    %147 = vrot.lane.b32.xlu0 %v143, 64
    %v148 = vpop.permute.xlu0 %147
    %149 = vrot.lane.b32.xlu0 %v144, 64
    %v150 = vpop.permute.xlu0 %149
    %v153 = vadd.f32 %v118, %v148
    %v154 = vadd.f32 %v121, %v150
    %v155 = vtanh.pop %v153
    %v156 = vtanh.pop %v154
    %v157 = vsub.f32 1.0, %v133
    %v158 = vsub.f32 1.0, %v135
    %161 = vrot.lane.b32.xlu0 %v155, 96
    %v162 = vpop.permute.xlu0 %161
    %163 = vrot.lane.b32.xlu0 %v156, 96
    %v164 = vpop.permute.xlu0 %163
    %v167 = vmul.f32 %v157, %v162
    %v168 = vmul.f32 %v158, %v164
    %v169 = vpack.c.bf16 %v168, %v167
    %s170 = scalar_lea.vmem [#allocation5], 16
    %v171 = vld [vmem:[%s170] sm:$0xf]
    %v172 = vld [vmem:[%s170 + $0x4] sm:$0xf]
    %v173 = vld [vmem:[%s170 + $0x8] sm:$0xf]
    %v174 = vld [vmem:[%s170 + $0xc] sm:$0xf]
    %s175 = scalar_lea.vmem %s2, 1
    %v176 = vld [vmem:[%s175] sm:$0x1]
    %v178 = vlaneseq
    %v179 = vshrl.u32 %v178, 7
    %v180 = vsub.s32 0, %v179
    %v181 = vrot.slane %v176, %v180
    %184 = vrot.lane.b32.xlu0 %v169, 96
    %v185 = vpop.permute.xlu0 %184
    %v190 = vunpack.c.l.b16 %v171
    %v191 = vunpack.c.l.b16 %v172
    %v192 = vunpack.c.l.b16 %v173
    %v193 = vunpack.c.l.b16 %v174
    %v194 = vpack.c.b16 %v191, %v190
    %v195 = vpack.c.b16 %v193, %v192
    %v199 = vsel %vm79, %v185, 0
    %201 = vmatprep.subr.bf16.mxu0 0
    %202 = vmatpush1.bf16.msra.mxu0 %v194
    %203 = vmatprep.subr.bf16.mxu0 0
    %204 = vmatpush1.bf16.msra.mxu0 %v195
    %205 = vmatprep.subr.bf16.mxu0 0
    %206 = vmatpush1.bf16.msra.mxu0 0
    %207 = vmatprep.subr.bf16.mxu0 0
    %208 = vmatpush1.bf16.msra.mxu0 0
    %209 = vmatprep.subr.bf16.mxu0 0
    %210 = vmatpush1.bf16.msra.mxu0 0
    %211 = vmatprep.subr.bf16.mxu0 0
    %212 = vmatpush1.bf16.msra.mxu0 0
    %213 = vmatprep.subr.bf16.mxu0 0
    %214 = vmatpush1.bf16.msra.mxu0 0
    %215 = vmatprep.subr.bf16.mxu0 0
    %216 = vmatpush1.bf16.msra.mxu0 0
    %217 = vmatprep.subr.bf16.mxu0 0
    %218 = vmatpush1.bf16.msra.mxu0 0
    %219 = vmatprep.subr.bf16.mxu0 0
    %220 = vmatpush1.bf16.msra.mxu0 0
    %221 = vmatprep.subr.bf16.mxu0 0
    %222 = vmatpush1.bf16.msra.mxu0 0
    %223 = vmatprep.subr.bf16.mxu0 0
    %224 = vmatpush1.bf16.msra.mxu0 0
    %225 = vmatprep.subr.bf16.mxu0 0
    %226 = vmatpush1.bf16.msra.mxu0 0
    %227 = vmatprep.subr.bf16.mxu0 0
    %228 = vmatpush1.bf16.msra.mxu0 0
    %229 = vmatprep.subr.bf16.mxu0 0
    %230 = vmatpush1.bf16.msra.mxu0 0
    %231 = vmatprep.subr.bf16.mxu0 0
    %232 = vmatpush1.bf16.msra.mxu0 0
    %233 = vmatprep.mubr.bf16.mxu0 0
    %234 = vmatmul.mubr.bf16.gmra.mrb[0].mxu0 %v199
    %v235 = vpop.f32.mrb[0].mxu0
    %v236 = vadd.f32 %v181, %v235
    %v237 = vpop.f32.mrb[0].mxu0
    %v238 = vpop.f32.mrb[0].mxu0
    %v239 = vadd.f32 %v181, %v238
    %v240 = vpop.f32.mrb[0].mxu0
    %241 = vdwg.mxu0
    %v242 = vxor.u32 %v236, 2147483648
    %v243 = vxor.u32 %v239, 2147483648
    %v244 = vmul.f32 %v242, 1.442695
    %v245 = vpow.pop %v244
    %v246 = vmul.f32 %v243, 1.442695
    %v247 = vpow.pop %v246
    %v248 = vadd.f32 %v245, 1.0
    %v249 = vadd.f32 %v247, 1.0
    %v250 = vrcp.pop %v248
    %v251 = vmul.f32 1.0, %v250
    %v252 = vrcp.pop %v249
    %v253 = vmul.f32 1.0, %v252
    %s254 = scalar_lea.vmem %s3, 1
    %v255 = vld [vmem:[%s254] sm:$0x1]
    %v257 = vlaneseq
    %v258 = vshrl.u32 %v257, 7
    %v259 = vsub.s32 0, %v258
    %v260 = vrot.slane %v255, %v259
    %v262 = vmul.f32 %v251, %v260
    %v263 = vmul.f32 %v253, %v260
    %266 = vrot.lane.b32.xlu0 %v262, 64
    %v267 = vpop.permute.xlu0 %266
    %268 = vrot.lane.b32.xlu0 %v263, 64
    %v269 = vpop.permute.xlu0 %268
    %v272 = vadd.f32 %v236, %v267
    %v273 = vadd.f32 %v239, %v269
    %v274 = vtanh.pop %v272
    %v275 = vtanh.pop %v273
    %v276 = vsub.f32 1.0, %v251
    %v277 = vsub.f32 1.0, %v253
    %280 = vrot.lane.b32.xlu0 %v274, 96
    %v281 = vpop.permute.xlu0 %280
    %282 = vrot.lane.b32.xlu0 %v275, 96
    %v283 = vpop.permute.xlu0 %282
    %v286 = vmul.f32 %v276, %v281
    %v287 = vmul.f32 %v277, %v283
    %v288 = vld [vmem:[%s4] sm:$0x1]
    %v290 = vlaneseq
    %v291 = vshrl.u32 %v290, 7
    %v292 = vsub.s32 0, %v291
    %v293 = vrot.slane %v288, %v292
    %294 = vrot.lane.b32.xlu0 %v293, 32
    %v295 = vpop.permute.xlu0 %294
    %v297 = vmul.f32 %v286, %v295
    %v298 = vmul.f32 %v287, %v295
    %301 = vrot.lane.b32.xlu0 %v297, 96
    %v302 = vpop.permute.xlu0 %301
    %303 = vrot.lane.b32.xlu0 %v298, 96
    %v304 = vpop.permute.xlu0 %303
    %v307 = vsel %vm79, %v302, 0.0
    %308 = vadd.xlane.f32.xlu0 %v307
    %v309 = vpop.xlane.xlu0 %308
    %v310 = vsel %vm79, %v304, 0.0
    %311 = vadd.xlane.f32.xlu0 %v310
    %v312 = vpop.xlane.xlu0 %311
    %v313 = vld [vmem:[%s5] sm:$0x1]
    %v315 = vlaneseq
    %v316 = vshrl.u32 %v315, 7
    %v317 = vsub.s32 0, %v316
    %v318 = vrot.slane %v313, %v317
    %v320 = vadd.f32 %v309, %v318
    %v321 = vadd.f32 %v312, %v318
    %322 = vst [vmem:[#allocation7] sm:$0xff] %v320
    %323 = vst [vmem:[#allocation7 + $0x8] sm:$0xff] %v321
    // Predicated region
    $region34: #{tpu_custom_call.1} parent=1 // pred_check
      _
    $region35: #{tpu_custom_call.1} parent=1 // pred_check_branch
      %325 = sbr.rel (0) target = $region37
    $region36: #{tpu_custom_call.1} parent=1 // pred_region
      %s327 = ssub.s32 256, 256
      %328 = vsyncadd [#allocation4], %s327
      %s329 = sshll.u32 [#allocation7], 4
      %s330 = int_to_ptr.vmem [resolvable:$true] %s329
      %335 = dma.vmem_to_hbm [thread:$0]  %s330, 256, %s6, [#allocation4], 128, 128, 8
    $region37: #{tpu_custom_call.1} parent=1 // pred_fallthru
      _
    // Predicated region
    $region38: #{tpu_custom_call.1} parent=1 // pred_check
      _
    $region39: #{tpu_custom_call.1} parent=1 // pred_check_branch
      %337 = sbr.rel (0) target = $region41
    $region40: #{tpu_custom_call.1} parent=1 // pred_region
      %338 = dma.done [#allocation4], 256
    $region41: #{tpu_custom_call.1} parent=1 // pred_fallthru
      _
    %339 = vsyncpa [#allocation3], 1
    %340 = vsyncpa [#allocation6], 1
    %341 = vsyncpa [#allocation4], 1

</llo_original>
